<compile_context>
chip_gen: v6e
topology: v6e:2x2x1
jax: 0.10.0
libtpu: 0.0.40
codegen_flags: <defaults>
</compile_context>

<pallas_src>
import functools

import jax
import jax.numpy as jnp
import numpy as np
from jax import lax
from jax.experimental import pallas as pl
from jax.experimental.pallas import tpu as pltpu

ABITS = 8
WBITS = 8
QP_A = 2 ** (ABITS - 1) - 1   # 127
QP_W = 2 ** (WBITS - 1) - 1   # 127
MIN_RANGE = 1e-6

TM_MAX = 256   # row tile for quant_linear
TN_MAX = 256   # output-feature tile for quant_linear (multiple of 128)


def _round_up(v, m):
    return (v + m - 1) // m * m


# ---------------------------------------------------------------------------
# Weight quantization (per-tensor, symmetric) — hoisted out of the kernel.
# Returns the quantized weight pre-transposed to (K, Nout) in bf16 (exact for
# integer values <= 127) plus the scalar scale.
# ---------------------------------------------------------------------------
def quantize_weight(w):
    w = w.astype(jnp.float32)                       # (Nout, K)
    max_w = jnp.maximum(jnp.max(jnp.abs(w)), MIN_RANGE)
    s_w = max_w / QP_W
    wq = jnp.round(w / s_w)
    return wq.T.astype(jnp.bfloat16), s_w           # (K, Nout), scalar


# ---------------------------------------------------------------------------
# Kernel 1: quantized linear
#   y = (round(x / s_x) @ wq + bias) * (s_x * s_w)   with per-token s_x
# (bias added BEFORE scaling, matching the reference _quantize_global)
# ---------------------------------------------------------------------------
def _quant_linear_kernel(s_w_ref, x_ref, w_ref, b_ref, o_ref, *, qp_a):
    x = x_ref[...]                                   # (tm, K) f32
    # per-token activation quantization (signed, symmetric)
    max_x = jnp.maximum(jnp.max(jnp.abs(x), axis=-1, keepdims=True), MIN_RANGE)
    s_x = max_x / qp_a                               # (tm, 1)
    xq = jnp.round(x / s_x)                          # exact ints in [-127, 127]

    acc = jnp.dot(xq.astype(jnp.bfloat16), w_ref[...],
                  preferred_element_type=jnp.float32)   # (tm, tn) f32 accum
    out = acc + b_ref[...]                           # (1, tn) broadcast
    o_ref[...] = out * (s_x * s_w_ref[0])


def quant_linear(x2d, wq_t, s_w, b):
    """x2d: (M, K) f32, wq_t: (K, Nout) bf16 quantized, s_w scalar, b: (Nout,)."""
    M, K = x2d.shape
    Nout = wq_t.shape[1]

    tm = M if M <= TM_MAX else TM_MAX
    tn = Nout if Nout <= TN_MAX else TN_MAX
    Mp = _round_up(M, tm)
    Np = _round_up(Nout, tn)

    xp = x2d if Mp == M else jnp.pad(x2d, ((0, Mp - M), (0, 0)))
    wp = wq_t if Np == Nout else jnp.pad(wq_t, ((0, 0), (0, Np - Nout)))
    bp = b.reshape(1, Nout).astype(jnp.float32)
    if Np != Nout:
        bp = jnp.pad(bp, ((0, 0), (0, Np - Nout)))

    kernel = functools.partial(_quant_linear_kernel, qp_a=QP_A)
    out = pl.pallas_call(
        kernel,
        out_shape=jax.ShapeDtypeStruct((Mp, Np), jnp.float32),
        grid=(Mp // tm, Np // tn),
        in_specs=[
            pl.BlockSpec(memory_space=pltpu.MemorySpace.SMEM),      # s_w scalar
            pl.BlockSpec((tm, K), lambda i, j: (i, 0)),             # x rows
            pl.BlockSpec((K, tn), lambda i, j: (0, j)),             # weight cols
            pl.BlockSpec((1, tn), lambda i, j: (0, j)),             # bias cols
        ],
        out_specs=pl.BlockSpec((tm, tn), lambda i, j: (i, j)),
        compiler_params=pltpu.CompilerParams(
            dimension_semantics=("parallel", "parallel")),
    )(s_w.reshape(1).astype(jnp.float32), xp, wp, bp)
    return out[:M, :Nout]


# ---------------------------------------------------------------------------
# Kernel 2: scaled-dot-product attention core.
# One batch element per grid step, all heads processed from the fused
# (N, 3C) qkv slab; output written lane-dense as (N, C) (head-major columns,
# which is exactly torch's (attn @ v).transpose(1,2).reshape(B,N,C) layout).
# ---------------------------------------------------------------------------
def _attn_kernel(qkv_ref, o_ref, *, num_heads, head_dim, scale):
    C = num_heads * head_dim
    blk = qkv_ref[0]                                 # (N, 3C) f32
    outs = []
    for h in range(num_heads):                       # static unroll over heads
        lo = h * head_dim
        q = (blk[:, lo:lo + head_dim] * scale).astype(jnp.bfloat16)
        k = blk[:, C + lo:C + lo + head_dim].astype(jnp.bfloat16)
        v = blk[:, 2 * C + lo:2 * C + lo + head_dim].astype(jnp.bfloat16)

        # q @ k^T without an explicit in-kernel transpose
        s = lax.dot_general(q, k, (((1,), (1,)), ((), ())),
                            preferred_element_type=jnp.float32)     # (N, N)
        s = s - jnp.max(s, axis=-1, keepdims=True)
        p = jnp.exp(s)
        p = p * pl.reciprocal(jnp.sum(p, axis=-1, keepdims=True), approx=True)
        o = jnp.dot(p.astype(jnp.bfloat16), v,
                    preferred_element_type=jnp.float32)             # (N, Dh)
        outs.append(o)
    o_ref[0] = jnp.concatenate(outs, axis=-1)        # (N, C) lane-dense


def mha_core(qkv3, num_heads, head_dim, scale):
    B, N, C3 = qkv3.shape
    C = num_heads * head_dim
    kernel = functools.partial(_attn_kernel, num_heads=num_heads,
                               head_dim=head_dim, scale=scale)
    return pl.pallas_call(
        kernel,
        out_shape=jax.ShapeDtypeStruct((B, N, C), jnp.float32),
        grid=(B,),
        in_specs=[pl.BlockSpec((1, N, C3), lambda b: (b, 0, 0))],
        out_specs=pl.BlockSpec((1, N, C), lambda b: (b, 0, 0)),
        compiler_params=pltpu.CompilerParams(dimension_semantics=("parallel",)),
    )(qkv3)


# ---------------------------------------------------------------------------
# Attention.forward
# ---------------------------------------------------------------------------
def attention_forward(x, qkv_w, qkv_b, proj_w, proj_b, *, num_heads,
                      prefix_token_num=0):
    # With per-token activation quantization (the module's config here) the
    # prefix_token_num > 0 branch reduces exactly to the plain per-token path.
    # TODO(synk): per-tensor activation quant combined with prefix_token_num > 0
    # (the prefix_qmodule split path) is not wired up.
    del prefix_token_num
    B, N, C = x.shape
    head_dim = C // num_heads
    scale = head_dim ** (-0.5)

    x2d = x.reshape(B * N, C).astype(jnp.float32)

    qkv_wq, qkv_sw = quantize_weight(qkv_w)
    proj_wq, proj_sw = quantize_weight(proj_w)

    qkv = quant_linear(x2d, qkv_wq, qkv_sw, qkv_b)           # (B*N, 3C)
    qkv3 = qkv.reshape(B, N, 3 * C)                          # free reshape

    o = mha_core(qkv3, num_heads, head_dim, scale)           # (B, N, C)

    out = quant_linear(o.reshape(B * N, C), proj_wq, proj_sw, proj_b)
    return out.reshape(B, N, C)


# ---------------------------------------------------------------------------
# Pure-JAX reference (mirrors the PyTorch math) for correctness check
# ---------------------------------------------------------------------------
def _ref_quant_linear(x2d, w, b):
    max_x = jnp.maximum(jnp.max(jnp.abs(x2d), axis=-1, keepdims=True), MIN_RANGE)
    s_x = max_x / QP_A
    xq = jnp.round(x2d / s_x)
    max_w = jnp.maximum(jnp.max(jnp.abs(w)), MIN_RANGE)
    s_w = max_w / QP_W
    wq = jnp.round(w / s_w)
    out = xq @ wq.T + b[None, :]
    return out * (s_x * s_w)


def ref_forward(x, qkv_w, qkv_b, proj_w, proj_b, num_heads):
    B, N, C = x.shape
    Dh = C // num_heads
    qkv = _ref_quant_linear(x.reshape(B * N, C), qkv_w, qkv_b)
    qkv = qkv.reshape(B, N, 3, num_heads, Dh).transpose(2, 0, 3, 1, 4)
    q, k, v = qkv[0] * (Dh ** -0.5), qkv[1], qkv[2]
    attn = jax.nn.softmax(q @ jnp.swapaxes(k, -2, -1), axis=-1)
    o = (attn @ v).transpose(0, 2, 1, 3).reshape(B, N, C)
    return _ref_quant_linear(o.reshape(B * N, C), proj_w, proj_b).reshape(B, N, C)


if __name__ == "__main__":
    key = jax.random.PRNGKey(0)
    B, N, C, H = 2, 8, 32, 4      # batch, seq, dim, num_heads  (head_dim = 8)
    k1, k2, k3, k4, k5 = jax.random.split(key, 5)
    qkv_w = jax.random.normal(k1, (3 * C, C), jnp.float32) * 0.05
    qkv_b = jax.random.normal(k2, (3 * C,), jnp.float32) * 0.05
    proj_w = jax.random.normal(k3, (C, C), jnp.float32) * 0.05
    proj_b = jax.random.normal(k4, (C,), jnp.float32) * 0.05
    x = jax.random.normal(k5, (B, N, C), jnp.float32)

    fwd = jax.jit(functools.partial(attention_forward, num_heads=H))
    out = jax.block_until_ready(fwd(x, qkv_w, qkv_b, proj_w, proj_b))

    ref = ref_forward(x, qkv_w, qkv_b, proj_w, proj_b, H)
    np.testing.assert_allclose(np.asarray(out), np.asarray(ref),
                               rtol=2e-2, atol=2e-2)
    print("KERNEL_OK")
</pallas_src>

<mosaic_0001>
module attributes {stable_mosaic.version = 11 : i64} {
  func.func @_quant_linear_kernel(%arg0: i32, %arg1: i32, %arg2: memref<1xf32, #tpu.memory_space<smem>>, %arg3: memref<16x32xf32, #tpu.memory_space<vmem>>, %arg4: memref<32x96xbf16, #tpu.memory_space<vmem>>, %arg5: memref<1x96xf32, #tpu.memory_space<vmem>>, %arg6: memref<16x96xf32, #tpu.memory_space<vmem>>) attributes {dimension_semantics = [#tpu.dimension_semantics<parallel>, #tpu.dimension_semantics<parallel>], iteration_bounds = array<i64: 1, 1>, scalar_prefetch = 0 : i64, scratch_operands = 0 : i64, tpu.core_type = #tpu.core_type<tc>, window_params = [{transform_indices = @transform_0, window_bounds = array<i64: 1>}, {transform_indices = @transform_1, window_bounds = array<i64: 16, 32>}, {transform_indices = @transform_2, window_bounds = array<i64: 32, 96>}, {transform_indices = @transform_3, window_bounds = array<i64: 1, 96>}, {transform_indices = @transform_4, window_bounds = array<i64: 16, 96>}]} {
    %c0 = arith.constant 0 : index
    %c0_0 = arith.constant 0 : index
    %0 = vector.load %arg3[%c0, %c0_0] : memref<16x32xf32, #tpu.memory_space<vmem>>, vector<16x32xf32>
    %1 = math.absf %0 : vector<16x32xf32>
    %cst = arith.constant dense<0xFF800000> : vector<16xf32>
    %2 = vector.multi_reduction <maximumf>, %1, %cst [1] : vector<16x32xf32> to vector<16xf32>
    %3 = vector.shape_cast %2 : vector<16xf32> to vector<16x1xf32>
    %cst_1 = arith.constant 9.99999997E-7 : f32
    %4 = vector.broadcast %cst_1 : f32 to vector<16x1xf32>
    %5 = arith.maximumf %3, %4 : vector<16x1xf32>
    %cst_2 = arith.constant 1.270000e+02 : f32
    %6 = vector.broadcast %cst_2 : f32 to vector<16x1xf32>
    %7 = arith.divf %5, %6 : vector<16x1xf32>
    %8 = vector.broadcast %7 : vector<16x1xf32> to vector<16x32xf32>
    %9 = arith.divf %0, %8 : vector<16x32xf32>
    %10 = math.roundeven %9 : vector<16x32xf32>
    %11 = arith.truncf %10 : vector<16x32xf32> to vector<16x32xbf16>
    %c0_3 = arith.constant 0 : index
    %c0_4 = arith.constant 0 : index
    %12 = vector.load %arg4[%c0_3, %c0_4] : memref<32x96xbf16, #tpu.memory_space<vmem>>, vector<32x96xbf16>
    %cst_5 = arith.constant dense<0.000000e+00> : vector<16x96xf32>
    %13 = tpu.matmul %11, %12, %cst_5 {dimension_numbers = #tpu.dot_dimension_numbers<[1], [0], [0], [1], [0, 0, 1, 1], [], []>} : vector<16x32xbf16>, vector<32x96xbf16>, vector<16x96xf32> -> vector<16x96xf32>
    %c0_6 = arith.constant 0 : index
    %c0_7 = arith.constant 0 : index
    %14 = vector.load %arg5[%c0_6, %c0_7] : memref<1x96xf32, #tpu.memory_space<vmem>>, vector<1x96xf32>
    %15 = vector.broadcast %14 : vector<1x96xf32> to vector<16x96xf32>
    %16 = arith.addf %13, %15 : vector<16x96xf32>
    %c0_8 = arith.constant 0 : index
    %17 = memref.load %arg2[%c0_8] : memref<1xf32, #tpu.memory_space<smem>>
    %18 = vector.broadcast %17 : f32 to vector<16x1xf32>
    %19 = arith.mulf %7, %18 : vector<16x1xf32>
    %20 = vector.broadcast %19 : vector<16x1xf32> to vector<16x96xf32>
    %21 = arith.mulf %16, %20 : vector<16x96xf32>
    %c0_9 = arith.constant 0 : index
    %c0_10 = arith.constant 0 : index
    %22 = vector.load %arg6[%c0_9, %c0_10] : memref<16x96xf32, #tpu.memory_space<vmem>>, vector<16x96xf32>
    tpu.vector_store %arg6[%c0_9, %c0_10], %21 {strides = array<i32>} : memref<16x96xf32, #tpu.memory_space<vmem>>, vector<16x96xf32>,
    return
  }
  func.func @transform_0(%arg0: i32, %arg1: i32) -> i32 {
    %c0_i32 = arith.constant 0 : i32
    %c0_i32_0 = arith.constant 0 : i32
    return %c0_i32 : i32
  }
  func.func @transform_1(%arg0: i32, %arg1: i32) -> (i32, i32) {
    %c0_i32 = arith.constant 0 : i32
    %c0_i32_0 = arith.constant 0 : i32
    return %arg0, %c0_i32 : i32, i32
  }
  func.func @transform_2(%arg0: i32, %arg1: i32) -> (i32, i32) {
    %c0_i32 = arith.constant 0 : i32
    %c0_i32_0 = arith.constant 0 : i32
    return %c0_i32, %arg1 : i32, i32
  }
  func.func @transform_3(%arg0: i32, %arg1: i32) -> (i32, i32) {
    %c0_i32 = arith.constant 0 : i32
    %c0_i32_0 = arith.constant 0 : i32
    return %c0_i32, %arg1 : i32, i32
  }
  func.func @transform_4(%arg0: i32, %arg1: i32) -> (i32, i32) {
    %c0_i32 = arith.constant 0 : i32
    return %arg0, %arg1 : i32, i32
  }
}

module attributes {stable_mosaic.version = 11 : i64} {
  func.func @_attn_kernel(%arg0: i32, %arg1: memref<1x8x96xf32, #tpu.memory_space<vmem>>, %arg2: memref<1x8x32xf32, #tpu.memory_space<vmem>>) attributes {dimension_semantics = [#tpu.dimension_semantics<parallel>], iteration_bounds = array<i64: 2>, scalar_prefetch = 0 : i64, scratch_operands = 0 : i64, tpu.core_type = #tpu.core_type<tc>, window_params = [{transform_indices = @transform_0, window_bounds = array<i64: 1, 8, 96>}, {transform_indices = @transform_1, window_bounds = array<i64: 1, 8, 32>}]} {
    %c0 = arith.constant 0 : index
    %c0_0 = arith.constant 0 : index
    %c0_1 = arith.constant 0 : index
    %0 = vector.load %arg1[%c0, %c0_0, %c0_1] : memref<1x8x96xf32, #tpu.memory_space<vmem>>, vector<1x8x96xf32>
    %1 = vector.shape_cast %0 : vector<1x8x96xf32> to vector<8x96xf32>
    %2 = vector.extract_strided_slice %1 {offsets = [0, 0], sizes = [8, 8], strides = [1, 1]} : vector<8x96xf32> to vector<8x8xf32>
    %cst = arith.constant 0.353553385 : f32
    %3 = vector.broadcast %cst : f32 to vector<8x8xf32>
    %4 = arith.mulf %2, %3 : vector<8x8xf32>
    %5 = arith.truncf %4 : vector<8x8xf32> to vector<8x8xbf16>
    %6 = vector.extract_strided_slice %1 {offsets = [0, 32], sizes = [8, 8], strides = [1, 1]} : vector<8x96xf32> to vector<8x8xf32>
    %7 = arith.truncf %6 : vector<8x8xf32> to vector<8x8xbf16>
    %8 = vector.extract_strided_slice %1 {offsets = [0, 64], sizes = [8, 8], strides = [1, 1]} : vector<8x96xf32> to vector<8x8xf32>
    %9 = arith.truncf %8 : vector<8x8xf32> to vector<8x8xbf16>
    %cst_2 = arith.constant dense<0.000000e+00> : vector<8x8xf32>
    %10 = tpu.matmul %5, %7, %cst_2 {dimension_numbers = #tpu.dot_dimension_numbers<[1], [1], [0], [0], [0, 0, 1, 0], [], []>} : vector<8x8xbf16>, vector<8x8xbf16>, vector<8x8xf32> -> vector<8x8xf32>
    %cst_3 = arith.constant dense<0xFF800000> : vector<8xf32>
    %11 = vector.multi_reduction <maximumf>, %10, %cst_3 [1] : vector<8x8xf32> to vector<8xf32>
    %12 = vector.shape_cast %11 : vector<8xf32> to vector<8x1xf32>
    %13 = vector.broadcast %12 : vector<8x1xf32> to vector<8x8xf32>
    %14 = arith.subf %10, %13 : vector<8x8xf32>
    %15 = math.exp %14 : vector<8x8xf32>
    %cst_4 = arith.constant dense<0.000000e+00> : vector<8xf32>
    %16 = vector.multi_reduction <add>, %15, %cst_4 [1] : vector<8x8xf32> to vector<8xf32>
    %17 = vector.shape_cast %16 : vector<8xf32> to vector<8x1xf32>
    %18 = tpu.reciprocal %17 {approx = true} : vector<8x1xf32> -> vector<8x1xf32>
    %19 = vector.broadcast %18 : vector<8x1xf32> to vector<8x8xf32>
    %20 = arith.mulf %15, %19 : vector<8x8xf32>
    %21 = arith.truncf %20 : vector<8x8xf32> to vector<8x8xbf16>
    %cst_5 = arith.constant dense<0.000000e+00> : vector<8x8xf32>
    %22 = tpu.matmul %21, %9, %cst_5 {dimension_numbers = #tpu.dot_dimension_numbers<[1], [0], [0], [1], [0, 0, 1, 1], [], []>} : vector<8x8xbf16>, vector<8x8xbf16>, vector<8x8xf32> -> vector<8x8xf32>
    %23 = vector.extract_strided_slice %1 {offsets = [0, 8], sizes = [8, 8], strides = [1, 1]} : vector<8x96xf32> to vector<8x8xf32>
    %cst_6 = arith.constant 0.353553385 : f32
    %24 = vector.broadcast %cst_6 : f32 to vector<8x8xf32>
    %25 = arith.mulf %23, %24 : vector<8x8xf32>
    %26 = arith.truncf %25 : vector<8x8xf32> to vector<8x8xbf16>
    %27 = vector.extract_strided_slice %1 {offsets = [0, 40], sizes = [8, 8], strides = [1, 1]} : vector<8x96xf32> to vector<8x8xf32>
    %28 = arith.truncf %27 : vector<8x8xf32> to vector<8x8xbf16>
    %29 = vector.extract_strided_slice %1 {offsets = [0, 72], sizes = [8, 8], strides = [1, 1]} : vector<8x96xf32> to vector<8x8xf32>
    %30 = arith.truncf %29 : vector<8x8xf32> to vector<8x8xbf16>
    %cst_7 = arith.constant dense<0.000000e+00> : vector<8x8xf32>
    %31 = tpu.matmul %26, %28, %cst_7 {dimension_numbers = #tpu.dot_dimension_numbers<[1], [1], [0], [0], [0, 0, 1, 0], [], []>} : vector<8x8xbf16>, vector<8x8xbf16>, vector<8x8xf32> -> vector<8x8xf32>
    %cst_8 = arith.constant dense<0xFF800000> : vector<8xf32>
    %32 = vector.multi_reduction <maximumf>, %31, %cst_8 [1] : vector<8x8xf32> to vector<8xf32>
    %33 = vector.shape_cast %32 : vector<8xf32> to vector<8x1xf32>
    %34 = vector.broadcast %33 : vector<8x1xf32> to vector<8x8xf32>
    %35 = arith.subf %31, %34 : vector<8x8xf32>
    %36 = math.exp %35 : vector<8x8xf32>
    %cst_9 = arith.constant dense<0.000000e+00> : vector<8xf32>
    %37 = vector.multi_reduction <add>, %36, %cst_9 [1] : vector<8x8xf32> to vector<8xf32>
    %38 = vector.shape_cast %37 : vector<8xf32> to vector<8x1xf32>
    %39 = tpu.reciprocal %38 {approx = true} : vector<8x1xf32> -> vector<8x1xf32>
    %40 = vector.broadcast %39 : vector<8x1xf32> to vector<8x8xf32>
    %41 = arith.mulf %36, %40 : vector<8x8xf32>
    %42 = arith.truncf %41 : vector<8x8xf32> to vector<8x8xbf16>
    %cst_10 = arith.constant dense<0.000000e+00> : vector<8x8xf32>
    %43 = tpu.matmul %42, %30, %cst_10 {dimension_numbers = #tpu.dot_dimension_numbers<[1], [0], [0], [1], [0, 0, 1, 1], [], []>} : vector<8x8xbf16>, vector<8x8xbf16>, vector<8x8xf32> -> vector<8x8xf32>
    %44 = vector.extract_strided_slice %1 {offsets = [0, 16], sizes = [8, 8], strides = [1, 1]} : vector<8x96xf32> to vector<8x8xf32>
    %cst_11 = arith.constant 0.353553385 : f32
    %45 = vector.broadcast %cst_11 : f32 to vector<8x8xf32>
    %46 = arith.mulf %44, %45 : vector<8x8xf32>
    %47 = arith.truncf %46 : vector<8x8xf32> to vector<8x8xbf16>
    %48 = vector.extract_strided_slice %1 {offsets = [0, 48], sizes = [8, 8], strides = [1, 1]} : vector<8x96xf32> to vector<8x8xf32>
    %49 = arith.truncf %48 : vector<8x8xf32> to vector<8x8xbf16>
    %50 = vector.extract_strided_slice %1 {offsets = [0, 80], sizes = [8, 8], strides = [1, 1]} : vector<8x96xf32> to vector<8x8xf32>
    %51 = arith.truncf %50 : vector<8x8xf32> to vector<8x8xbf16>
    %cst_12 = arith.constant dense<0.000000e+00> : vector<8x8xf32>
    %52 = tpu.matmul %47, %49, %cst_12 {dimension_numbers = #tpu.dot_dimension_numbers<[1], [1], [0], [0], [0, 0, 1, 0], [], []>} : vector<8x8xbf16>, vector<8x8xbf16>, vector<8x8xf32> -> vector<8x8xf32>
    %cst_13 = arith.constant dense<0xFF800000> : vector<8xf32>
    %53 = vector.multi_reduction <maximumf>, %52, %cst_13 [1] : vector<8x8xf32> to vector<8xf32>
    %54 = vector.shape_cast %53 : vector<8xf32> to vector<8x1xf32>
    %55 = vector.broadcast %54 : vector<8x1xf32> to vector<8x8xf32>
    %56 = arith.subf %52, %55 : vector<8x8xf32>
    %57 = math.exp %56 : vector<8x8xf32>
    %cst_14 = arith.constant dense<0.000000e+00> : vector<8xf32>
    %58 = vector.multi_reduction <add>, %57, %cst_14 [1] : vector<8x8xf32> to vector<8xf32>
    %59 = vector.shape_cast %58 : vector<8xf32> to vector<8x1xf32>
    %60 = tpu.reciprocal %59 {approx = true} : vector<8x1xf32> -> vector<8x1xf32>
    %61 = vector.broadcast %60 : vector<8x1xf32> to vector<8x8xf32>
    %62 = arith.mulf %57, %61 : vector<8x8xf32>
    %63 = arith.truncf %62 : vector<8x8xf32> to vector<8x8xbf16>
    %cst_15 = arith.constant dense<0.000000e+00> : vector<8x8xf32>
    %64 = tpu.matmul %63, %51, %cst_15 {dimension_numbers = #tpu.dot_dimension_numbers<[1], [0], [0], [1], [0, 0, 1, 1], [], []>} : vector<8x8xbf16>, vector<8x8xbf16>, vector<8x8xf32> -> vector<8x8xf32>
    %65 = vector.extract_strided_slice %1 {offsets = [0, 24], sizes = [8, 8], strides = [1, 1]} : vector<8x96xf32> to vector<8x8xf32>
    %cst_16 = arith.constant 0.353553385 : f32
    %66 = vector.broadcast %cst_16 : f32 to vector<8x8xf32>
    %67 = arith.mulf %65, %66 : vector<8x8xf32>
    %68 = arith.truncf %67 : vector<8x8xf32> to vector<8x8xbf16>
    %69 = vector.extract_strided_slice %1 {offsets = [0, 56], sizes = [8, 8], strides = [1, 1]} : vector<8x96xf32> to vector<8x8xf32>
    %70 = arith.truncf %69 : vector<8x8xf32> to vector<8x8xbf16>
    %71 = vector.extract_strided_slice %1 {offsets = [0, 88], sizes = [8, 8], strides = [1, 1]} : vector<8x96xf32> to vector<8x8xf32>
    %72 = arith.truncf %71 : vector<8x8xf32> to vector<8x8xbf16>
    %cst_17 = arith.constant dense<0.000000e+00> : vector<8x8xf32>
    %73 = tpu.matmul %68, %70, %cst_17 {dimension_numbers = #tpu.dot_dimension_numbers<[1], [1], [0], [0], [0, 0, 1, 0], [], []>} : vector<8x8xbf16>, vector<8x8xbf16>, vector<8x8xf32> -> vector<8x8xf32>
    %cst_18 = arith.constant dense<0xFF800000> : vector<8xf32>
    %74 = vector.multi_reduction <maximumf>, %73, %cst_18 [1] : vector<8x8xf32> to vector<8xf32>
    %75 = vector.shape_cast %74 : vector<8xf32> to vector<8x1xf32>
    %76 = vector.broadcast %75 : vector<8x1xf32> to vector<8x8xf32>
    %77 = arith.subf %73, %76 : vector<8x8xf32>
    %78 = math.exp %77 : vector<8x8xf32>
    %cst_19 = arith.constant dense<0.000000e+00> : vector<8xf32>
    %79 = vector.multi_reduction <add>, %78, %cst_19 [1] : vector<8x8xf32> to vector<8xf32>
    %80 = vector.shape_cast %79 : vector<8xf32> to vector<8x1xf32>
    %81 = tpu.reciprocal %80 {approx = true} : vector<8x1xf32> -> vector<8x1xf32>
    %82 = vector.broadcast %81 : vector<8x1xf32> to vector<8x8xf32>
    %83 = arith.mulf %78, %82 : vector<8x8xf32>
    %84 = arith.truncf %83 : vector<8x8xf32> to vector<8x8xbf16>
    %cst_20 = arith.constant dense<0.000000e+00> : vector<8x8xf32>
    %85 = tpu.matmul %84, %72, %cst_20 {dimension_numbers = #tpu.dot_dimension_numbers<[1], [0], [0], [1], [0, 0, 1, 1], [], []>} : vector<8x8xbf16>, vector<8x8xbf16>, vector<8x8xf32> -> vector<8x8xf32>
    %86 = tpu.concatenate %22, %43, %64, %85 in 1 : vector<8x8xf32>, vector<8x8xf32>, vector<8x8xf32>, vector<8x8xf32> -> vector<8x32xf32>
    %c0_21 = arith.constant 0 : index
    %c0_22 = arith.constant 0 : index
    %c0_23 = arith.constant 0 : index
    %87 = vector.load %arg2[%c0_21, %c0_22, %c0_23] : memref<1x8x32xf32, #tpu.memory_space<vmem>>, vector<1x8x32xf32>
    %88 = vector.shape_cast %87 : vector<1x8x32xf32> to vector<8x32xf32>
    %89 = vector.shape_cast %86 : vector<8x32xf32> to vector<1x8x32xf32>
    tpu.vector_store %arg2[%c0_21, %c0_22, %c0_23], %89 {strides = array<i32>} : memref<1x8x32xf32, #tpu.memory_space<vmem>>, vector<1x8x32xf32>,
    return
  }
  func.func @transform_0(%arg0: i32) -> (i32, i32, i32) {
    %c0_i32 = arith.constant 0 : i32
    %c0_i32_0 = arith.constant 0 : i32
    %c0_i32_1 = arith.constant 0 : i32
    return %arg0, %c0_i32, %c0_i32_0 : i32, i32, i32
  }
  func.func @transform_1(%arg0: i32) -> (i32, i32, i32) {
    %c0_i32 = arith.constant 0 : i32
    %c0_i32_0 = arith.constant 0 : i32
    %c0_i32_1 = arith.constant 0 : i32
    return %arg0, %c0_i32, %c0_i32_0 : i32, i32, i32
  }
}

module attributes {stable_mosaic.version = 11 : i64} {
  func.func @_quant_linear_kernel(%arg0: i32, %arg1: i32, %arg2: memref<1xf32, #tpu.memory_space<smem>>, %arg3: memref<16x32xf32, #tpu.memory_space<vmem>>, %arg4: memref<32x32xbf16, #tpu.memory_space<vmem>>, %arg5: memref<1x32xf32, #tpu.memory_space<vmem>>, %arg6: memref<16x32xf32, #tpu.memory_space<vmem>>) attributes {dimension_semantics = [#tpu.dimension_semantics<parallel>, #tpu.dimension_semantics<parallel>], iteration_bounds = array<i64: 1, 1>, scalar_prefetch = 0 : i64, scratch_operands = 0 : i64, tpu.core_type = #tpu.core_type<tc>, window_params = [{transform_indices = @transform_0, window_bounds = array<i64: 1>}, {transform_indices = @transform_1, window_bounds = array<i64: 16, 32>}, {transform_indices = @transform_2, window_bounds = array<i64: 32, 32>}, {transform_indices = @transform_3, window_bounds = array<i64: 1, 32>}, {transform_indices = @transform_4, window_bounds = array<i64: 16, 32>}]} {
    %c0 = arith.constant 0 : index
    %c0_0 = arith.constant 0 : index
    %0 = vector.load %arg3[%c0, %c0_0] : memref<16x32xf32, #tpu.memory_space<vmem>>, vector<16x32xf32>
    %1 = math.absf %0 : vector<16x32xf32>
    %cst = arith.constant dense<0xFF800000> : vector<16xf32>
    %2 = vector.multi_reduction <maximumf>, %1, %cst [1] : vector<16x32xf32> to vector<16xf32>
    %3 = vector.shape_cast %2 : vector<16xf32> to vector<16x1xf32>
    %cst_1 = arith.constant 9.99999997E-7 : f32
    %4 = vector.broadcast %cst_1 : f32 to vector<16x1xf32>
    %5 = arith.maximumf %3, %4 : vector<16x1xf32>
    %cst_2 = arith.constant 1.270000e+02 : f32
    %6 = vector.broadcast %cst_2 : f32 to vector<16x1xf32>
    %7 = arith.divf %5, %6 : vector<16x1xf32>
    %8 = vector.broadcast %7 : vector<16x1xf32> to vector<16x32xf32>
    %9 = arith.divf %0, %8 : vector<16x32xf32>
    %10 = math.roundeven %9 : vector<16x32xf32>
    %11 = arith.truncf %10 : vector<16x32xf32> to vector<16x32xbf16>
    %c0_3 = arith.constant 0 : index
    %c0_4 = arith.constant 0 : index
    %12 = vector.load %arg4[%c0_3, %c0_4] : memref<32x32xbf16, #tpu.memory_space<vmem>>, vector<32x32xbf16>
    %cst_5 = arith.constant dense<0.000000e+00> : vector<16x32xf32>
    %13 = tpu.matmul %11, %12, %cst_5 {dimension_numbers = #tpu.dot_dimension_numbers<[1], [0], [0], [1], [0, 0, 1, 1], [], []>} : vector<16x32xbf16>, vector<32x32xbf16>, vector<16x32xf32> -> vector<16x32xf32>
    %c0_6 = arith.constant 0 : index
    %c0_7 = arith.constant 0 : index
    %14 = vector.load %arg5[%c0_6, %c0_7] : memref<1x32xf32, #tpu.memory_space<vmem>>, vector<1x32xf32>
    %15 = vector.broadcast %14 : vector<1x32xf32> to vector<16x32xf32>
    %16 = arith.addf %13, %15 : vector<16x32xf32>
    %c0_8 = arith.constant 0 : index
    %17 = memref.load %arg2[%c0_8] : memref<1xf32, #tpu.memory_space<smem>>
    %18 = vector.broadcast %17 : f32 to vector<16x1xf32>
    %19 = arith.mulf %7, %18 : vector<16x1xf32>
    %20 = vector.broadcast %19 : vector<16x1xf32> to vector<16x32xf32>
    %21 = arith.mulf %16, %20 : vector<16x32xf32>
    %c0_9 = arith.constant 0 : index
    %c0_10 = arith.constant 0 : index
    %22 = vector.load %arg6[%c0_9, %c0_10] : memref<16x32xf32, #tpu.memory_space<vmem>>, vector<16x32xf32>
    tpu.vector_store %arg6[%c0_9, %c0_10], %21 {strides = array<i32>} : memref<16x32xf32, #tpu.memory_space<vmem>>, vector<16x32xf32>,
    return
  }
  func.func @transform_0(%arg0: i32, %arg1: i32) -> i32 {
    %c0_i32 = arith.constant 0 : i32
    %c0_i32_0 = arith.constant 0 : i32
    return %c0_i32 : i32
  }
  func.func @transform_1(%arg0: i32, %arg1: i32) -> (i32, i32) {
    %c0_i32 = arith.constant 0 : i32
    %c0_i32_0 = arith.constant 0 : i32
    return %arg0, %c0_i32 : i32, i32
  }
  func.func @transform_2(%arg0: i32, %arg1: i32) -> (i32, i32) {
    %c0_i32 = arith.constant 0 : i32
    %c0_i32_0 = arith.constant 0 : i32
    return %c0_i32, %arg1 : i32, i32
  }
  func.func @transform_3(%arg0: i32, %arg1: i32) -> (i32, i32) {
    %c0_i32 = arith.constant 0 : i32
    %c0_i32_0 = arith.constant 0 : i32
    return %c0_i32, %arg1 : i32, i32
  }
  func.func @transform_4(%arg0: i32, %arg1: i32) -> (i32, i32) {
    %c0_i32 = arith.constant 0 : i32
    return %arg0, %arg1 : i32, i32
  }
}

</mosaic_0001>

<llo_original>
// kernel: attention_forward.3
$region0: #{attention_forward.3}
  #allocation0 [shape = 'u32[]', space=smem, size = 0x4, offset = 0x4, fixed_abs, tag = 'smem constant byte address 0x4 - core index']
  #allocation1 [shape = 'u32[144,128]{1,0:T(1,128)}', space=vmem, size = 0x12000, scoped, tag = 'internal scratch']
  #allocation2 [shape = 'f32[1]{0:T(128)S(6)}', space=smem, size = 0x200, scoped, tag = 'scoped memory for attention_forward.3']
  %s0 = inlined_call_operand.<no memory space> [shape: f32[1], index: 0, kind: input, shape index: {}]
  %s1 = inlined_call_operand.vmem [shape: f32[16,32], index: 1, kind: input, shape index: {}]
  %s2 = inlined_call_operand.vmem [shape: bf16[32,96], index: 2, kind: input, shape index: {}]
  %s3 = inlined_call_operand.vmem [shape: f32[1,96], index: 3, kind: input, shape index: {}]
  %s4 = inlined_call_operand.vmem [shape: f32[16,96], index: 4, kind: output, shape index: {}]
  %s5 = sld [smem:[#allocation0]]
  $region26: #{attention_forward.3} parent=0
    _
  %s7 = ssub.s32 1, %s5
  %s8 = scalar_select 0, %s7, %s5
  %9 = sst [smem:[#allocation2]] %s0
  // Predicated region
  $region2: #{attention_forward.3} parent=0 // pred_check
    _
  $region3: #{attention_forward.3} parent=0 // pred_check_branch
    %11 = sbr.rel (0) target = $region5
  $region4: #{attention_forward.3} parent=0 // pred_region
    _
  $region5: #{attention_forward.3} parent=0 // pred_fallthru
    _
  // Predicated region
  $region6: #{attention_forward.3} parent=0 // pred_check
    _
  $region7: #{attention_forward.3} parent=0 // pred_check_branch
    %13 = sbr.rel (0) target = $region9
  $region8: #{attention_forward.3} parent=0 // pred_region
    _
  $region9: #{attention_forward.3} parent=0 // pred_fallthru
    _
  // Predicated region
  $region10: #{attention_forward.3} parent=0 // pred_check
    _
  $region11: #{attention_forward.3} parent=0 // pred_check_branch
    %15 = sbr.rel (0) target = $region13
  $region12: #{attention_forward.3} parent=0 // pred_region
    _
  $region13: #{attention_forward.3} parent=0 // pred_fallthru
    _
  // Predicated region
  $region14: #{attention_forward.3} parent=0 // pred_check
    _
  $region15: #{attention_forward.3} parent=0 // pred_check_branch
    %17 = sbr.rel (0) target = $region17
  $region16: #{attention_forward.3} parent=0 // pred_region
    _
  $region17: #{attention_forward.3} parent=0 // pred_fallthru
    _
  %v19 = vld [vmem:[%s1] sm:$0xff]
  %v20 = vld [vmem:[%s1 + $0x8] sm:$0xff]
  %v21 = vand.u32 2147483647, %v19
  %v22 = vand.u32 2147483647, %v20
  %vm23 = vcmask 261120
  %v24 = vsel %vm23, %v21, -inf
  %25 = vmax.xlane.f32.xlu0 %v24
  %v26 = vpop.xlane.xlu0 %25
  %v27 = vsel %vm23, %v22, -inf
  %28 = vmax.xlane.f32.xlu0 %v27
  %v29 = vpop.xlane.xlu0 %28
  %v30 = vmax.f32 %v26, 1e-06
  %v31 = vmax.f32 %v29, 1e-06
  %v32 = vrcp.pop 127.0
  %v33 = vmul.f32 %v30, %v32
  %v34 = vmul.f32 %v31, %v32
  %v35 = vrcp.pop %v33
  %v36 = vmul.f32 %v19, %v35
  %v37 = vrcp.pop %v34
  %v38 = vmul.f32 %v20, %v37
  %v39 = vround.ne.pseudo %v36
  %v40 = vround.ne.pseudo %v38
  %v41 = vpack.c.bf16 %v40, %v39
  %v42 = vld [vmem:[%s2] sm:$0xf]
  %v43 = vld [vmem:[%s2 + $0x4] sm:$0xf]
  %v44 = vld [vmem:[%s2 + $0x8] sm:$0xf]
  %v45 = vld [vmem:[%s2 + $0xc] sm:$0xf]
  %v46 = vld [vmem:[%s3] sm:$0x1]
  %v48 = vlaneseq
  %v49 = vshrl.u32 %v48, 7
  %v50 = vsub.s32 0, %v49
  %v51 = vrot.slane %v46, %v50
  %v57 = vunpack.c.l.b16 %v42
  %v58 = vunpack.c.l.b16 %v43
  %v59 = vunpack.c.l.b16 %v44
  %v60 = vunpack.c.l.b16 %v45
  %v61 = vpack.c.b16 %v58, %v57
  %v62 = vpack.c.b16 %v60, %v59
  %v66 = vsel %vm23, %v41, 0
  %68 = vmatprep.subr.bf16.mxu0 0
  %69 = vmatpush1.bf16.msra.mxu0 0
  %70 = vmatprep.subr.bf16.mxu0 0
  %71 = vmatpush1.bf16.msra.mxu0 0
  %72 = vmatprep.subr.bf16.mxu0 0
  %73 = vmatpush1.bf16.msra.mxu0 0
  %74 = vmatprep.subr.bf16.mxu0 0
  %75 = vmatpush1.bf16.msra.mxu0 0
  %76 = vmatprep.subr.bf16.mxu0 0
  %77 = vmatpush1.bf16.msra.mxu0 0
  %78 = vmatprep.subr.bf16.mxu0 0
  %79 = vmatpush1.bf16.msra.mxu0 0
  %80 = vmatprep.subr.bf16.mxu0 0
  %81 = vmatpush1.bf16.msra.mxu0 %v62
  %82 = vmatprep.subr.bf16.mxu0 0
  %83 = vmatpush1.bf16.msra.mxu0 %v61
  %84 = vmatprep.subr.bf16.mxu0 0
  %85 = vmatpush2.bf16.msra.mxu0 0
  %86 = vmatprep.subr.bf16.mxu0 0
  %87 = vmatpush2.bf16.msra.mxu0 0
  %88 = vmatprep.subr.bf16.mxu0 0
  %89 = vmatpush2.bf16.msra.mxu0 0
  %90 = vmatprep.subr.bf16.mxu0 0
  %91 = vmatpush2.bf16.msra.mxu0 0
  %92 = vmatprep.subr.bf16.mxu0 0
  %93 = vmatpush2.bf16.msra.mxu0 0
  %94 = vmatprep.subr.bf16.mxu0 0
  %95 = vmatpush2.bf16.msra.mxu0 0
  %96 = vmatprep.subr.bf16.mxu0 0
  %97 = vmatpush2.bf16.msra.mxu0 0
  %98 = vmatprep.subr.bf16.mxu0 0
  %99 = vmatpush2.bf16.msra.mxu0 0
  %100 = vmatprep.mubr.bf16.mxu0 0
  %101 = vmatmul.mubr.bf16.gmra.mxu0 %v66
  %v102 = vpop.f32.mrf.mxu0
  %v103 = vadd.f32 %v51, %v102
  %v104 = vpop.f32.mrf.mxu0
  %v105 = vpop.f32.mrf.mxu0
  %v106 = vadd.f32 %v51, %v105
  %v107 = vpop.f32.mrf.mxu0
  %108 = vdwg.mxu0
  %s109 = sld [smem:[#allocation2]]
  %v110 = vstv %s109
  %v111 = vmul.f32 %v33, %v110
  %v112 = vmul.f32 %v34, %v110
  %v113 = vmul.f32 %v103, %v111
  %v114 = vmul.f32 %v106, %v112
  %vm115 = vcmask 785408
  %116 = vst.msk [vmem:[%s4] sm:$0xff] %vm115, %v113
  %117 = vst.msk [vmem:[%s4 + $0x8] sm:$0xff] %vm115, %v114
  // Predicated region
  $region18: #{attention_forward.3} parent=0 // pred_check
    _
  $region19: #{attention_forward.3} parent=0 // pred_check_branch
    %119 = sbr.rel (0) target = $region21
  $region20: #{attention_forward.3} parent=0 // pred_region
    _
  $region21: #{attention_forward.3} parent=0 // pred_fallthru
    _
  // Predicated region
  $region22: #{attention_forward.3} parent=0 // pred_check
    _
  $region23: #{attention_forward.3} parent=0 // pred_check_branch
    %121 = sbr.rel (0) target = $region25
  $region24: #{attention_forward.3} parent=0 // pred_region
    _
  $region25: #{attention_forward.3} parent=0 // pred_fallthru
    _

// kernel: attention_forward.5
$region0: #{attention_forward.5}
  #allocation0 [shape = 'u32[]', space=smem, size = 0x4, offset = 0x4, fixed_abs, tag = 'smem constant byte address 0x4 - core index']
  #allocation1 [shape = 'u32[144,128]{1,0:T(1,128)}', space=vmem, size = 0x12000, scoped, tag = 'internal scratch']
  #allocation2 [shape = 'f32[1]{0:T(128)S(6)}', space=smem, size = 0x200, scoped, tag = 'scoped memory for attention_forward.5']
  %s0 = inlined_call_operand.<no memory space> [shape: f32[1], index: 0, kind: input, shape index: {}]
  %s1 = inlined_call_operand.vmem [shape: f32[16,32], index: 1, kind: input, shape index: {}]
  %s2 = inlined_call_operand.vmem [shape: bf16[32,32], index: 2, kind: input, shape index: {}]
  %s3 = inlined_call_operand.vmem [shape: f32[1,32], index: 3, kind: input, shape index: {}]
  %s4 = inlined_call_operand.hbm [shape: f32[16,32], index: 4, kind: output, shape index: {}]
  %s5 = sld [smem:[#allocation0]]
  $region26: #{attention_forward.5} parent=0
    _
  %s7 = ssub.s32 1, %s5
  %s8 = scalar_select 0, %s7, %s5
  %9 = sst [smem:[#allocation2]] %s0
  $region1: #{attention_forward.5} parent=0
    #allocation3 [shape = 'u8[8192]{0}', space=vmem, size = 0x2000, scoped, tag = 'output window, operand 0, single buffered']
    #allocation4 [shape = 's32[1]{0}', space=sflag, size = 0x4, scoped, tag = 'scoped memory for attention_forward.5']
    %10 = vsyncpa [#allocation4], 0
    // Predicated region
    $region2: #{attention_forward.5} parent=1 // pred_check
      _
    $region3: #{attention_forward.5} parent=1 // pred_check_branch
      %12 = sbr.rel (0) target = $region5
    $region4: #{attention_forward.5} parent=1 // pred_region
      _
    $region5: #{attention_forward.5} parent=1 // pred_fallthru
      _
    // Predicated region
    $region6: #{attention_forward.5} parent=1 // pred_check
      _
    $region7: #{attention_forward.5} parent=1 // pred_check_branch
      %14 = sbr.rel (0) target = $region9
    $region8: #{attention_forward.5} parent=1 // pred_region
      _
    $region9: #{attention_forward.5} parent=1 // pred_fallthru
      _
    // Predicated region
    $region10: #{attention_forward.5} parent=1 // pred_check
      _
    $region11: #{attention_forward.5} parent=1 // pred_check_branch
      %16 = sbr.rel (0) target = $region13
    $region12: #{attention_forward.5} parent=1 // pred_region
      _
    $region13: #{attention_forward.5} parent=1 // pred_fallthru
      _
    // Predicated region
    $region14: #{attention_forward.5} parent=1 // pred_check
      _
    $region15: #{attention_forward.5} parent=1 // pred_check_branch
      %18 = sbr.rel (0) target = $region17
    $region16: #{attention_forward.5} parent=1 // pred_region
      _
    $region17: #{attention_forward.5} parent=1 // pred_fallthru
      _
    %v20 = vld [vmem:[%s1] sm:$0xff]
    %v21 = vld [vmem:[%s1 + $0x8] sm:$0xff]
    %v22 = vand.u32 2147483647, %v20
    %v23 = vand.u32 2147483647, %v21
    %vm24 = vcmask 261120
    %v25 = vsel %vm24, %v22, -inf
    %26 = vmax.xlane.f32.xlu0 %v25
    %v27 = vpop.xlane.xlu0 %26
    %v28 = vsel %vm24, %v23, -inf
    %29 = vmax.xlane.f32.xlu0 %v28
    %v30 = vpop.xlane.xlu0 %29
    %v31 = vmax.f32 %v27, 1e-06
    %v32 = vmax.f32 %v30, 1e-06
    %v33 = vrcp.pop 127.0
    %v34 = vmul.f32 %v31, %v33
    %v35 = vmul.f32 %v32, %v33
    %v36 = vrcp.pop %v34
    %v37 = vmul.f32 %v20, %v36
    %v38 = vrcp.pop %v35
    %v39 = vmul.f32 %v21, %v38
    %v40 = vround.ne.pseudo %v37
    %v41 = vround.ne.pseudo %v39
    %v42 = vpack.c.bf16 %v41, %v40
    %v43 = vld [vmem:[%s2] sm:$0xf]
    %v44 = vld [vmem:[%s2 + $0x4] sm:$0xf]
    %v45 = vld [vmem:[%s2 + $0x8] sm:$0xf]
    %v46 = vld [vmem:[%s2 + $0xc] sm:$0xf]
    %v47 = vld [vmem:[%s3] sm:$0x1]
    %v49 = vlaneseq
    %v50 = vshrl.u32 %v49, 7
    %v51 = vsub.s32 0, %v50
    %v52 = vrot.slane %v47, %v51
    %v58 = vunpack.c.l.b16 %v43
    %v59 = vunpack.c.l.b16 %v44
    %v60 = vunpack.c.l.b16 %v45
    %v61 = vunpack.c.l.b16 %v46
    %v62 = vpack.c.b16 %v59, %v58
    %v63 = vpack.c.b16 %v61, %v60
    %v67 = vsel %vm24, %v42, 0
    %69 = vmatprep.subr.bf16.mxu0 0
    %70 = vmatpush1.bf16.msra.mxu0 0
    %71 = vmatprep.subr.bf16.mxu0 0
    %72 = vmatpush1.bf16.msra.mxu0 0
    %73 = vmatprep.subr.bf16.mxu0 0
    %74 = vmatpush1.bf16.msra.mxu0 0
    %75 = vmatprep.subr.bf16.mxu0 0
    %76 = vmatpush1.bf16.msra.mxu0 0
    %77 = vmatprep.subr.bf16.mxu0 0
    %78 = vmatpush1.bf16.msra.mxu0 0
    %79 = vmatprep.subr.bf16.mxu0 0
    %80 = vmatpush1.bf16.msra.mxu0 0
    %81 = vmatprep.subr.bf16.mxu0 0
    %82 = vmatpush1.bf16.msra.mxu0 %v63
    %83 = vmatprep.subr.bf16.mxu0 0
    %84 = vmatpush1.bf16.msra.mxu0 %v62
    %85 = vmatprep.subr.bf16.mxu0 0
    %86 = vmatpush2.bf16.msra.mxu0 0
    %87 = vmatprep.subr.bf16.mxu0 0
    %88 = vmatpush2.bf16.msra.mxu0 0
    %89 = vmatprep.subr.bf16.mxu0 0
    %90 = vmatpush2.bf16.msra.mxu0 0
    %91 = vmatprep.subr.bf16.mxu0 0
    %92 = vmatpush2.bf16.msra.mxu0 0
    %93 = vmatprep.subr.bf16.mxu0 0
    %94 = vmatpush2.bf16.msra.mxu0 0
    %95 = vmatprep.subr.bf16.mxu0 0
    %96 = vmatpush2.bf16.msra.mxu0 0
    %97 = vmatprep.subr.bf16.mxu0 0
    %98 = vmatpush2.bf16.msra.mxu0 0
    %99 = vmatprep.subr.bf16.mxu0 0
    %100 = vmatpush2.bf16.msra.mxu0 0
    %101 = vmatprep.mubr.bf16.mxu0 0
    %102 = vmatmul.mubr.bf16.gmra.mxu0 %v67
    %v103 = vpop.f32.mrf.mxu0
    %v104 = vadd.f32 %v52, %v103
    %v105 = vpop.f32.mrf.mxu0
    %v106 = vpop.f32.mrf.mxu0
    %v107 = vadd.f32 %v52, %v106
    %v108 = vpop.f32.mrf.mxu0
    %109 = vdwg.mxu0
    %s110 = sld [smem:[#allocation2]]
    %v111 = vstv %s110
    %v112 = vmul.f32 %v34, %v111
    %v113 = vmul.f32 %v35, %v111
    %v114 = vmul.f32 %v104, %v112
    %v115 = vmul.f32 %v107, %v113
    %116 = vst.msk [vmem:[#allocation3] sm:$0xff] %vm24, %v114
    %117 = vst.msk [vmem:[#allocation3 + $0x8] sm:$0xff] %vm24, %v115
    // Predicated region
    $region18: #{attention_forward.5} parent=1 // pred_check
      _
    $region19: #{attention_forward.5} parent=1 // pred_check_branch
      %119 = sbr.rel (0) target = $region21
    $region20: #{attention_forward.5} parent=1 // pred_region
      %s121 = ssub.s32 256, 256
      %122 = vsyncadd [#allocation4], %s121
      %s123 = sshll.u32 [#allocation3], 4
      %s124 = int_to_ptr.vmem [resolvable:$true] %s123
      %129 = dma.vmem_to_hbm [thread:$0]  %s124, 256, %s4, [#allocation4], 128, 128, 8
    $region21: #{attention_forward.5} parent=1 // pred_fallthru
      _
    // Predicated region
    $region22: #{attention_forward.5} parent=1 // pred_check
      _
    $region23: #{attention_forward.5} parent=1 // pred_check_branch
      %131 = sbr.rel (0) target = $region25
    $region24: #{attention_forward.5} parent=1 // pred_region
      %132 = dma.done [#allocation4], 256
    $region25: #{attention_forward.5} parent=1 // pred_fallthru
      _
    %133 = vsyncpa [#allocation4], 1

// kernel: attention_forward.4
$region0: #{attention_forward.4}
  #allocation0 [shape = 'u32[]', space=smem, size = 0x4, offset = 0x4, fixed_abs, tag = 'smem constant byte address 0x4 - core index']
  #allocation1 [shape = 'u32[144,128]{1,0:T(1,128)}', space=vmem, size = 0x12000, scoped, tag = 'internal scratch']
  %s0 = inlined_call_operand.vmem [shape: f32[2,8,96], index: 0, kind: input, shape index: {}]
  %s1 = inlined_call_operand.vmem [shape: f32[2,8,32], index: 1, kind: output, shape index: {}]
  %s2 = sld [smem:[#allocation0]]
  $region37: #{attention_forward.4} parent=0
    _
  %s4 = ssub.s32 1, %s2
  %s5 = scalar_select 0, %s4, %s2
  loop: start=0, step=1, limit=4
  $region2: #{attention_forward.4} parent=0 // loop_pre_header
    _
  $region3: #{attention_forward.4} parent=0 // loop_header
    %s7 = sphi 0, %s11
    %p8 = scmp.ge.s32.totalorder %s7, 4
    %s17 = sphi 0, %s19
    %s20 = sphi 0, %s17
    %s21 = sphi 0, %s20
    %s37 = sphi 0, %s21
    %s43 = sphi 0, %s45
    %s46 = sphi 0, %s43
    %s47 = sphi 0, %s46
    %s63 = sphi 0, %s47
  $region4: #{attention_forward.4} parent=0 // loop_header_branch
    %10 = sbr.rel (%p8) target = $region8
  $region5: #{attention_forward.4} parent=0 // loop_body
    %s12 = ssub.s32 %s7, 1
    %s13 = ssub.s32 %s7, 2
    %s14 = sadd.s32 %s7, 1
    %s15 = ssub.s32 %s7, %s14
    %p16 = scmp.eq.s32.totalorder %s15, 0
    %s18 = sadd.s32 %s17, 1
    %s19 = scalar_select %p16, %s17, %s18
    %p22 = pneg %p16
    %p23 = scmp.eq.s32.totalorder %s7, 1
    %p24 = por %p22, %p23
    %p25 = scmp.ne.s32.totalorder %s17, %s20
    %p26 = scmp.eq.s32.totalorder %s7, 0
    %p27 = por %p25, %p26
    %p28 = scmp.ne.s32.totalorder %s17, %s20
    %p29 = scmp.eq.s32.totalorder %s12, 1
    %p30 = por %p28, %p29
    %p31 = scmp.ne.s32.totalorder %s20, %s21
    %p32 = scmp.eq.s32.totalorder %s12, 0
    %p33 = por %p31, %p32
    %p34 = scmp.ne.s32.totalorder %s20, %s21
    %p35 = scmp.eq.s32.totalorder %s13, 1
    %p36 = por %p34, %p35
    %p38 = scmp.ne.s32.totalorder %s21, %s37
    %p39 = scmp.eq.s32.totalorder %s13, 0
    %p40 = por %p38, %p39
    %s41 = ssub.s32 %s7, %s14
    %p42 = scmp.eq.s32.totalorder %s41, 0
    %s44 = sadd.s32 %s43, 1
    %s45 = scalar_select %p42, %s43, %s44
    %p48 = pneg %p42
    %p49 = scmp.eq.s32.totalorder %s7, 1
    %p50 = por %p48, %p49
    %p51 = scmp.ne.s32.totalorder %s43, %s46
    %p52 = scmp.eq.s32.totalorder %s7, 0
    %p53 = por %p51, %p52
    %p54 = scmp.ne.s32.totalorder %s43, %s46
    %p55 = scmp.eq.s32.totalorder %s12, 1
    %p56 = por %p54, %p55
    %p57 = scmp.ne.s32.totalorder %s46, %s47
    %p58 = scmp.eq.s32.totalorder %s12, 0
    %p59 = por %p57, %p58
    %p60 = scmp.ne.s32.totalorder %s46, %s47
    %p61 = scmp.eq.s32.totalorder %s13, 1
    %p62 = por %p60, %p61
    %p64 = scmp.ne.s32.totalorder %s47, %s63
    %p65 = scmp.eq.s32.totalorder %s13, 0
    %p66 = por %p64, %p65
    %p67 = scmp.le.s32.totalorder 1, %s7
    %p68 = scmp.lt.s32.totalorder %s7, 3
    %p69 = pnand %p67, %p68
    %p70 = pneg %p69
    // Predicated region
    $region9: #{attention_forward.4} parent=5 // pred_check
      _
    $region10: #{attention_forward.4} parent=5 // pred_check_branch
      %72 = sbr.rel (%p69) target = $region12
    $region11: #{attention_forward.4} parent=5 // pred_region
      %s73 = ssub.s32 %s7, 1
    $region12: #{attention_forward.4} parent=5 // pred_fallthru
      _
    %p74 = scmp.lt.s32.totalorder %s7, 2
    // Predicated region
    $region13: #{attention_forward.4} parent=5 // pred_check
      %p75 = pneg %p74
    $region14: #{attention_forward.4} parent=5 // pred_check_branch
      %77 = sbr.rel (%p75) target = $region16
    $region15: #{attention_forward.4} parent=5 // pred_region
      // Predicated region
      $region17: #{attention_forward.4} parent=15 // pred_check
        %p78 = pneg %p27
      $region18: #{attention_forward.4} parent=15 // pred_check_branch
        %80 = sbr.rel (%p78) target = $region20
      $region19: #{attention_forward.4} parent=15 // pred_region
        %p81 = scmp.lt.s32.totalorder %s7, 1
        %s82 = scalar_select %p81, %s7, 1
        %s83 = smul.addr %s82, 8
        %s84 = scalar_lea.vmem %s0, %s83
      $region20: #{attention_forward.4} parent=15 // pred_fallthru
        _
    $region16: #{attention_forward.4} parent=5 // pred_fallthru
      _
    %p85 = scmp.le.s32.totalorder 1, %s7
    %p86 = scmp.lt.s32.totalorder %s7, 3
    %p87 = pnand %p85, %p86
    %p88 = pneg %p87
    // Predicated region
    $region21: #{attention_forward.4} parent=5 // pred_check
      _
    $region22: #{attention_forward.4} parent=5 // pred_check_branch
      %90 = sbr.rel (%p87) target = $region24
    $region23: #{attention_forward.4} parent=5 // pred_region
      %s91 = ssub.s32 %s7, 1
      %p92 = scmp.lt.s32.totalorder %s12, 1
      %s93 = scalar_select %p92, %s12, 1
      %s94 = smul.addr %s93, 8
      %s95 = scalar_lea.vmem %s0, %s94
      %p96 = pneg %p33
      %p97 = pneg %p30
      %p98 = pneg %p59
      %p99 = pneg %p56
      %p100 = scmp.lt.s32.totalorder %s12, 1
      %s101 = scalar_select %p100, %s12, 1
      %s102 = smul.addr %s101, 8
      %s103 = scalar_lea.vmem %s1, %s102
      %p104 = scmp.lt.s32.totalorder %s12, 1
      %s105 = scalar_select %p104, %s12, 1
      %s106 = smul.addr %s105, 8
      %s107 = scalar_lea.vmem %s0, %s106
      %p108 = scmp.lt.s32.totalorder %s12, 1
      %s109 = scalar_select %p108, %s12, 1
      %s110 = smul.addr %s109, 8
      %s111 = scalar_lea.vmem %s1, %s110
      %v113 = vld [vmem:[%s107] sm:$0xff]
      %v114 = vmul.f32 %v113, 0.35355338
      %v115 = vpack.c.bf16 %v114, %v114
      %v116 = vpack.c.bf16 %v113, %v113
      %118 = vrot.lane.b32.xlu0 %v116, 96
      %v119 = vpop.permute.xlu0 %118
      %vm120 = vcmask 64512
      %v122 = vsel %vm120, %v115, 0
      %v125 = vsel %vm120, %v119, 0
      %127 = vmatprep.subr.bf16.mxu0 0
      %128 = vmatpush1.bf16.xpose.msra.mxu0 0
      %129 = vmatprep.subr.bf16.mxu0 0
      %130 = vmatpush1.bf16.xpose.msra.mxu0 0
      %131 = vmatprep.subr.bf16.mxu0 0
      %132 = vmatpush1.bf16.xpose.msra.mxu0 0
      %133 = vmatprep.subr.bf16.mxu0 0
      %134 = vmatpush1.bf16.xpose.msra.mxu0 0
      %135 = vmatprep.subr.bf16.mxu0 0
      %136 = vmatpush1.bf16.xpose.msra.mxu0 0
      %137 = vmatprep.subr.bf16.mxu0 0
      %138 = vmatpush1.bf16.xpose.msra.mxu0 0
      %139 = vmatprep.subr.bf16.mxu0 0
      %140 = vmatpush1.bf16.xpose.msra.mxu0 0
      %141 = vmatprep.subr.bf16.mxu0 0
      %142 = vmatpush1.bf16.xpose.msra.mxu0 %v125
      %143 = vmatprep.subr.bf16.mxu0 0
      %144 = vmatpush2.bf16.xpose.msra.mxu0 0
      %145 = vmatprep.subr.bf16.mxu0 0
      %146 = vmatpush2.bf16.xpose.msra.mxu0 0
      %147 = vmatprep.subr.bf16.mxu0 0
      %148 = vmatpush2.bf16.xpose.msra.mxu0 0
      %149 = vmatprep.subr.bf16.mxu0 0
      %150 = vmatpush2.bf16.xpose.msra.mxu0 0
      %151 = vmatprep.subr.bf16.mxu0 0
      %152 = vmatpush2.bf16.xpose.msra.mxu0 0
      %153 = vmatprep.subr.bf16.mxu0 0
      %154 = vmatpush2.bf16.xpose.msra.mxu0 0
      %155 = vmatprep.subr.bf16.mxu0 0
      %156 = vmatpush2.bf16.xpose.msra.mxu0 0
      %157 = vmatprep.subr.bf16.mxu0 0
      %158 = vmatpush2.bf16.xpose.msra.mxu0 0
      %159 = vmatprep.mubr.bf16.mxu0 0
      %160 = vmatmul.mubr.bf16.gmra.mxu0 %v122
      %v161 = vpop.f32.mrf.mxu0
      %v162 = vadd.f32 0.0, %v161
      %v163 = vpop.f32.mrf.mxu0
      %v164 = vpop.f32.mrf.mxu0
      %v165 = vpop.f32.mrf.mxu0
      %166 = vdwg.mxu0
      %v167 = vsel %vm120, %v162, -inf
      %168 = vmax.xlane.f32.xlu0 %v167
      %v169 = vpop.xlane.xlu0 %168
      %v170 = vsub.f32 %v162, %v169
      %v171 = vmul.f32 %v170, 1.442695
      %v172 = vpow.pop %v171
      %v173 = vsel %vm120, %v172, 0.0
      %174 = vadd.xlane.f32.xlu0 %v173
      %v175 = vpop.xlane.xlu0 %174
      %v176 = vrcp.pop %v175
      %v177 = vmul.f32 %v172, %v176
      %v178 = vpack.c.bf16 %v177, %v177
      %179 = vrot.lane.b32.xlu0 %v116, 64
      %v180 = vpop.permute.xlu0 %179
      %v182 = vsel %vm120, %v178, 0
      %vm184 = vcmask 1043456
      %v186 = vsel %vm184, %v180, 0
      %188 = vmatprep.subr.bf16.mxu0 0
      %189 = vmatpush1.bf16.msra.mxu0 0
      %190 = vmatprep.subr.bf16.mxu0 0
      %191 = vmatpush1.bf16.msra.mxu0 0
      %192 = vmatprep.subr.bf16.mxu0 0
      %193 = vmatpush1.bf16.msra.mxu0 0
      %194 = vmatprep.subr.bf16.mxu0 0
      %195 = vmatpush1.bf16.msra.mxu0 0
      %196 = vmatprep.subr.bf16.mxu0 0
      %197 = vmatpush1.bf16.msra.mxu0 0
      %198 = vmatprep.subr.bf16.mxu0 0
      %199 = vmatpush1.bf16.msra.mxu0 0
      %200 = vmatprep.subr.bf16.mxu0 0
      %201 = vmatpush1.bf16.msra.mxu0 0
      %202 = vmatprep.subr.bf16.mxu0 0
      %203 = vmatpush1.bf16.msra.mxu0 %v186
      %204 = vmatprep.subr.bf16.mxu0 0
      %205 = vmatpush2.bf16.msra.mxu0 0
      %206 = vmatprep.subr.bf16.mxu0 0
      %207 = vmatpush2.bf16.msra.mxu0 0
      %208 = vmatprep.subr.bf16.mxu0 0
      %209 = vmatpush2.bf16.msra.mxu0 0
      %210 = vmatprep.subr.bf16.mxu0 0
      %211 = vmatpush2.bf16.msra.mxu0 0
      %212 = vmatprep.subr.bf16.mxu0 0
      %213 = vmatpush2.bf16.msra.mxu0 0
      %214 = vmatprep.subr.bf16.mxu0 0
      %215 = vmatpush2.bf16.msra.mxu0 0
      %216 = vmatprep.subr.bf16.mxu0 0
      %217 = vmatpush2.bf16.msra.mxu0 0
      %218 = vmatprep.subr.bf16.mxu0 0
      %219 = vmatpush2.bf16.msra.mxu0 0
      %220 = vmatprep.mubr.bf16.mxu0 0
      %221 = vmatmul.mubr.bf16.gmra.mxu0 %v182
      %v222 = vpop.f32.mrf.mxu0
      %v223 = vadd.f32 0.0, %v222
      %v224 = vpop.f32.mrf.mxu0
      %v225 = vpop.f32.mrf.mxu0
      %v226 = vpop.f32.mrf.mxu0
      %227 = vdwg.mxu0
      %229 = vrot.lane.b32.xlu0 %v115, 120
      %v230 = vpop.permute.xlu0 %229
      %231 = vrot.lane.b32.xlu0 %v116, 88
      %v232 = vpop.permute.xlu0 %231
      %v234 = vsel %vm120, %v230, 0
      %v237 = vsel %vm120, %v232, 0
      %239 = vmatprep.subr.bf16.mxu0 0
      %240 = vmatpush1.bf16.xpose.msra.mxu0 0
      %241 = vmatprep.subr.bf16.mxu0 0
      %242 = vmatpush1.bf16.xpose.msra.mxu0 0
      %243 = vmatprep.subr.bf16.mxu0 0
      %244 = vmatpush1.bf16.xpose.msra.mxu0 0
      %245 = vmatprep.subr.bf16.mxu0 0
      %246 = vmatpush1.bf16.xpose.msra.mxu0 0
      %247 = vmatprep.subr.bf16.mxu0 0
      %248 = vmatpush1.bf16.xpose.msra.mxu0 0
      %249 = vmatprep.subr.bf16.mxu0 0
      %250 = vmatpush1.bf16.xpose.msra.mxu0 0
      %251 = vmatprep.subr.bf16.mxu0 0
      %252 = vmatpush1.bf16.xpose.msra.mxu0 0
      %253 = vmatprep.subr.bf16.mxu0 0
      %254 = vmatpush1.bf16.xpose.msra.mxu0 %v237
      %255 = vmatprep.subr.bf16.mxu0 0
      %256 = vmatpush2.bf16.xpose.msra.mxu0 0
      %257 = vmatprep.subr.bf16.mxu0 0
      %258 = vmatpush2.bf16.xpose.msra.mxu0 0
      %259 = vmatprep.subr.bf16.mxu0 0
      %260 = vmatpush2.bf16.xpose.msra.mxu0 0
      %261 = vmatprep.subr.bf16.mxu0 0
      %262 = vmatpush2.bf16.xpose.msra.mxu0 0
      %263 = vmatprep.subr.bf16.mxu0 0
      %264 = vmatpush2.bf16.xpose.msra.mxu0 0
      %265 = vmatprep.subr.bf16.mxu0 0
      %266 = vmatpush2.bf16.xpose.msra.mxu0 0
      %267 = vmatprep.subr.bf16.mxu0 0
      %268 = vmatpush2.bf16.xpose.msra.mxu0 0
      %269 = vmatprep.subr.bf16.mxu0 0
      %270 = vmatpush2.bf16.xpose.msra.mxu0 0
      %271 = vmatprep.mubr.bf16.mxu0 0
      %272 = vmatmul.mubr.bf16.gmra.mxu0 %v234
      %v273 = vpop.f32.mrf.mxu0
      %v274 = vadd.f32 0.0, %v273
      %v275 = vpop.f32.mrf.mxu0
      %v276 = vpop.f32.mrf.mxu0
      %v277 = vpop.f32.mrf.mxu0
      %278 = vdwg.mxu0
      %v279 = vsel %vm120, %v274, -inf
      %280 = vmax.xlane.f32.xlu0 %v279
      %v281 = vpop.xlane.xlu0 %280
      %v282 = vsub.f32 %v274, %v281
      %v283 = vmul.f32 %v282, 1.442695
      %v284 = vpow.pop %v283
      %v285 = vsel %vm120, %v284, 0.0
      %286 = vadd.xlane.f32.xlu0 %v285
      %v287 = vpop.xlane.xlu0 %286
      %v288 = vrcp.pop %v287
      %v289 = vmul.f32 %v284, %v288
      %v290 = vpack.c.bf16 %v289, %v289
      %291 = vrot.lane.b32.xlu0 %v116, 56
      %v292 = vpop.permute.xlu0 %291
      %v294 = vsel %vm120, %v290, 0
      %v297 = vsel %vm184, %v292, 0
      %299 = vmatprep.subr.bf16.mxu0 0
      %300 = vmatpush1.bf16.msra.mxu0 0
      %301 = vmatprep.subr.bf16.mxu0 0
      %302 = vmatpush1.bf16.msra.mxu0 0
      %303 = vmatprep.subr.bf16.mxu0 0
      %304 = vmatpush1.bf16.msra.mxu0 0
      %305 = vmatprep.subr.bf16.mxu0 0
      %306 = vmatpush1.bf16.msra.mxu0 0
      %307 = vmatprep.subr.bf16.mxu0 0
      %308 = vmatpush1.bf16.msra.mxu0 0
      %309 = vmatprep.subr.bf16.mxu0 0
      %310 = vmatpush1.bf16.msra.mxu0 0
      %311 = vmatprep.subr.bf16.mxu0 0
      %312 = vmatpush1.bf16.msra.mxu0 0
      %313 = vmatprep.subr.bf16.mxu0 0
      %314 = vmatpush1.bf16.msra.mxu0 %v297
      %315 = vmatprep.subr.bf16.mxu0 0
      %316 = vmatpush2.bf16.msra.mxu0 0
      %317 = vmatprep.subr.bf16.mxu0 0
      %318 = vmatpush2.bf16.msra.mxu0 0
      %319 = vmatprep.subr.bf16.mxu0 0
      %320 = vmatpush2.bf16.msra.mxu0 0
      %321 = vmatprep.subr.bf16.mxu0 0
      %322 = vmatpush2.bf16.msra.mxu0 0
      %323 = vmatprep.subr.bf16.mxu0 0
      %324 = vmatpush2.bf16.msra.mxu0 0
      %325 = vmatprep.subr.bf16.mxu0 0
      %326 = vmatpush2.bf16.msra.mxu0 0
      %327 = vmatprep.subr.bf16.mxu0 0
      %328 = vmatpush2.bf16.msra.mxu0 0
      %329 = vmatprep.subr.bf16.mxu0 0
      %330 = vmatpush2.bf16.msra.mxu0 0
      %331 = vmatprep.mubr.bf16.mxu0 0
      %332 = vmatmul.mubr.bf16.gmra.mxu0 %v294
      %v333 = vpop.f32.mrf.mxu0
      %v334 = vadd.f32 0.0, %v333
      %v335 = vpop.f32.mrf.mxu0
      %v336 = vpop.f32.mrf.mxu0
      %v337 = vpop.f32.mrf.mxu0
      %338 = vdwg.mxu0
      %339 = vrot.lane.b32.xlu0 %v115, 112
      %v340 = vpop.permute.xlu0 %339
      %341 = vrot.lane.b32.xlu0 %v116, 80
      %v342 = vpop.permute.xlu0 %341
      %v344 = vsel %vm120, %v340, 0
      %v347 = vsel %vm120, %v342, 0
      %349 = vmatprep.subr.bf16.mxu0 0
      %350 = vmatpush1.bf16.xpose.msra.mxu0 0
      %351 = vmatprep.subr.bf16.mxu0 0
      %352 = vmatpush1.bf16.xpose.msra.mxu0 0
      %353 = vmatprep.subr.bf16.mxu0 0
      %354 = vmatpush1.bf16.xpose.msra.mxu0 0
      %355 = vmatprep.subr.bf16.mxu0 0
      %356 = vmatpush1.bf16.xpose.msra.mxu0 0
      %357 = vmatprep.subr.bf16.mxu0 0
      %358 = vmatpush1.bf16.xpose.msra.mxu0 0
      %359 = vmatprep.subr.bf16.mxu0 0
      %360 = vmatpush1.bf16.xpose.msra.mxu0 0
      %361 = vmatprep.subr.bf16.mxu0 0
      %362 = vmatpush1.bf16.xpose.msra.mxu0 0
      %363 = vmatprep.subr.bf16.mxu0 0
      %364 = vmatpush1.bf16.xpose.msra.mxu0 %v347
      %365 = vmatprep.subr.bf16.mxu0 0
      %366 = vmatpush2.bf16.xpose.msra.mxu0 0
      %367 = vmatprep.subr.bf16.mxu0 0
      %368 = vmatpush2.bf16.xpose.msra.mxu0 0
      %369 = vmatprep.subr.bf16.mxu0 0
      %370 = vmatpush2.bf16.xpose.msra.mxu0 0
      %371 = vmatprep.subr.bf16.mxu0 0
      %372 = vmatpush2.bf16.xpose.msra.mxu0 0
      %373 = vmatprep.subr.bf16.mxu0 0
      %374 = vmatpush2.bf16.xpose.msra.mxu0 0
      %375 = vmatprep.subr.bf16.mxu0 0
      %376 = vmatpush2.bf16.xpose.msra.mxu0 0
      %377 = vmatprep.subr.bf16.mxu0 0
      %378 = vmatpush2.bf16.xpose.msra.mxu0 0
      %379 = vmatprep.subr.bf16.mxu0 0
      %380 = vmatpush2.bf16.xpose.msra.mxu0 0
      %381 = vmatprep.mubr.bf16.mxu0 0
      %382 = vmatmul.mubr.bf16.gmra.mxu0 %v344
      %v383 = vpop.f32.mrf.mxu0
      %v384 = vadd.f32 0.0, %v383
      %v385 = vpop.f32.mrf.mxu0
      %v386 = vpop.f32.mrf.mxu0
      %v387 = vpop.f32.mrf.mxu0
      %388 = vdwg.mxu0
      %v389 = vsel %vm120, %v384, -inf
      %390 = vmax.xlane.f32.xlu0 %v389
      %v391 = vpop.xlane.xlu0 %390
      %v392 = vsub.f32 %v384, %v391
      %v393 = vmul.f32 %v392, 1.442695
      %v394 = vpow.pop %v393
      %v395 = vsel %vm120, %v394, 0.0
      %396 = vadd.xlane.f32.xlu0 %v395
      %v397 = vpop.xlane.xlu0 %396
      %v398 = vrcp.pop %v397
      %v399 = vmul.f32 %v394, %v398
      %v400 = vpack.c.bf16 %v399, %v399
      %401 = vrot.lane.b32.xlu0 %v116, 48
      %v402 = vpop.permute.xlu0 %401
      %v404 = vsel %vm120, %v400, 0
      %v407 = vsel %vm184, %v402, 0
      %409 = vmatprep.subr.bf16.mxu0 0
      %410 = vmatpush1.bf16.msra.mxu0 0
      %411 = vmatprep.subr.bf16.mxu0 0
      %412 = vmatpush1.bf16.msra.mxu0 0
      %413 = vmatprep.subr.bf16.mxu0 0
      %414 = vmatpush1.bf16.msra.mxu0 0
      %415 = vmatprep.subr.bf16.mxu0 0
      %416 = vmatpush1.bf16.msra.mxu0 0
      %417 = vmatprep.subr.bf16.mxu0 0
      %418 = vmatpush1.bf16.msra.mxu0 0
      %419 = vmatprep.subr.bf16.mxu0 0
      %420 = vmatpush1.bf16.msra.mxu0 0
      %421 = vmatprep.subr.bf16.mxu0 0
      %422 = vmatpush1.bf16.msra.mxu0 0
      %423 = vmatprep.subr.bf16.mxu0 0
      %424 = vmatpush1.bf16.msra.mxu0 %v407
      %425 = vmatprep.subr.bf16.mxu0 0
      %426 = vmatpush2.bf16.msra.mxu0 0
      %427 = vmatprep.subr.bf16.mxu0 0
      %428 = vmatpush2.bf16.msra.mxu0 0
      %429 = vmatprep.subr.bf16.mxu0 0
      %430 = vmatpush2.bf16.msra.mxu0 0
      %431 = vmatprep.subr.bf16.mxu0 0
      %432 = vmatpush2.bf16.msra.mxu0 0
      %433 = vmatprep.subr.bf16.mxu0 0
      %434 = vmatpush2.bf16.msra.mxu0 0
      %435 = vmatprep.subr.bf16.mxu0 0
      %436 = vmatpush2.bf16.msra.mxu0 0
      %437 = vmatprep.subr.bf16.mxu0 0
      %438 = vmatpush2.bf16.msra.mxu0 0
      %439 = vmatprep.subr.bf16.mxu0 0
      %440 = vmatpush2.bf16.msra.mxu0 0
      %441 = vmatprep.mubr.bf16.mxu0 0
      %442 = vmatmul.mubr.bf16.gmra.mxu0 %v404
      %v443 = vpop.f32.mrf.mxu0
      %v444 = vadd.f32 0.0, %v443
      %v445 = vpop.f32.mrf.mxu0
      %v446 = vpop.f32.mrf.mxu0
      %v447 = vpop.f32.mrf.mxu0
      %448 = vdwg.mxu0
      %449 = vrot.lane.b32.xlu0 %v115, 104
      %v450 = vpop.permute.xlu0 %449
      %451 = vrot.lane.b32.xlu0 %v116, 72
      %v452 = vpop.permute.xlu0 %451
      %v454 = vsel %vm120, %v450, 0
      %v457 = vsel %vm120, %v452, 0
      %459 = vmatprep.subr.bf16.mxu0 0
      %460 = vmatpush1.bf16.xpose.msra.mxu0 0
      %461 = vmatprep.subr.bf16.mxu0 0
      %462 = vmatpush1.bf16.xpose.msra.mxu0 0
      %463 = vmatprep.subr.bf16.mxu0 0
      %464 = vmatpush1.bf16.xpose.msra.mxu0 0
      %465 = vmatprep.subr.bf16.mxu0 0
      %466 = vmatpush1.bf16.xpose.msra.mxu0 0
      %467 = vmatprep.subr.bf16.mxu0 0
      %468 = vmatpush1.bf16.xpose.msra.mxu0 0
      %469 = vmatprep.subr.bf16.mxu0 0
      %470 = vmatpush1.bf16.xpose.msra.mxu0 0
      %471 = vmatprep.subr.bf16.mxu0 0
      %472 = vmatpush1.bf16.xpose.msra.mxu0 0
      %473 = vmatprep.subr.bf16.mxu0 0
      %474 = vmatpush1.bf16.xpose.msra.mxu0 %v457
      %475 = vmatprep.subr.bf16.mxu0 0
      %476 = vmatpush2.bf16.xpose.msra.mxu0 0
      %477 = vmatprep.subr.bf16.mxu0 0
      %478 = vmatpush2.bf16.xpose.msra.mxu0 0
      %479 = vmatprep.subr.bf16.mxu0 0
      %480 = vmatpush2.bf16.xpose.msra.mxu0 0
      %481 = vmatprep.subr.bf16.mxu0 0
      %482 = vmatpush2.bf16.xpose.msra.mxu0 0
      %483 = vmatprep.subr.bf16.mxu0 0
      %484 = vmatpush2.bf16.xpose.msra.mxu0 0
      %485 = vmatprep.subr.bf16.mxu0 0
      %486 = vmatpush2.bf16.xpose.msra.mxu0 0
      %487 = vmatprep.subr.bf16.mxu0 0
      %488 = vmatpush2.bf16.xpose.msra.mxu0 0
      %489 = vmatprep.subr.bf16.mxu0 0
      %490 = vmatpush2.bf16.xpose.msra.mxu0 0
      %491 = vmatprep.mubr.bf16.mxu0 0
      %492 = vmatmul.mubr.bf16.gmra.mxu0 %v454
      %v493 = vpop.f32.mrf.mxu0
      %v494 = vadd.f32 0.0, %v493
      %v495 = vpop.f32.mrf.mxu0
      %v496 = vpop.f32.mrf.mxu0
      %v497 = vpop.f32.mrf.mxu0
      %498 = vdwg.mxu0
      %v499 = vsel %vm120, %v494, -inf
      %500 = vmax.xlane.f32.xlu0 %v499
      %v501 = vpop.xlane.xlu0 %500
      %v502 = vsub.f32 %v494, %v501
      %v503 = vmul.f32 %v502, 1.442695
      %v504 = vpow.pop %v503
      %v505 = vsel %vm120, %v504, 0.0
      %506 = vadd.xlane.f32.xlu0 %v505
      %v507 = vpop.xlane.xlu0 %506
      %v508 = vrcp.pop %v507
      %v509 = vmul.f32 %v504, %v508
      %v510 = vpack.c.bf16 %v509, %v509
      %511 = vrot.lane.b32.xlu0 %v116, 40
      %v512 = vpop.permute.xlu0 %511
      %v514 = vsel %vm120, %v510, 0
      %v517 = vsel %vm184, %v512, 0
      %519 = vmatprep.subr.bf16.mxu0 0
      %520 = vmatpush1.bf16.msra.mxu0 0
      %521 = vmatprep.subr.bf16.mxu0 0
      %522 = vmatpush1.bf16.msra.mxu0 0
      %523 = vmatprep.subr.bf16.mxu0 0
      %524 = vmatpush1.bf16.msra.mxu0 0
      %525 = vmatprep.subr.bf16.mxu0 0
      %526 = vmatpush1.bf16.msra.mxu0 0
      %527 = vmatprep.subr.bf16.mxu0 0
      %528 = vmatpush1.bf16.msra.mxu0 0
      %529 = vmatprep.subr.bf16.mxu0 0
      %530 = vmatpush1.bf16.msra.mxu0 0
      %531 = vmatprep.subr.bf16.mxu0 0
      %532 = vmatpush1.bf16.msra.mxu0 0
      %533 = vmatprep.subr.bf16.mxu0 0
      %534 = vmatpush1.bf16.msra.mxu0 %v517
      %535 = vmatprep.subr.bf16.mxu0 0
      %536 = vmatpush2.bf16.msra.mxu0 0
      %537 = vmatprep.subr.bf16.mxu0 0
      %538 = vmatpush2.bf16.msra.mxu0 0
      %539 = vmatprep.subr.bf16.mxu0 0
      %540 = vmatpush2.bf16.msra.mxu0 0
      %541 = vmatprep.subr.bf16.mxu0 0
      %542 = vmatpush2.bf16.msra.mxu0 0
      %543 = vmatprep.subr.bf16.mxu0 0
      %544 = vmatpush2.bf16.msra.mxu0 0
      %545 = vmatprep.subr.bf16.mxu0 0
      %546 = vmatpush2.bf16.msra.mxu0 0
      %547 = vmatprep.subr.bf16.mxu0 0
      %548 = vmatpush2.bf16.msra.mxu0 0
      %549 = vmatprep.subr.bf16.mxu0 0
      %550 = vmatpush2.bf16.msra.mxu0 0
      %551 = vmatprep.mubr.bf16.mxu0 0
      %552 = vmatmul.mubr.bf16.gmra.mxu0 %v514
      %v553 = vpop.f32.mrf.mxu0
      %v554 = vadd.f32 0.0, %v553
      %v555 = vpop.f32.mrf.mxu0
      %v556 = vpop.f32.mrf.mxu0
      %v557 = vpop.f32.mrf.mxu0
      %558 = vdwg.mxu0
      %560 = vrot.lane.b32.xlu0 %v334, 8
      %v561 = vpop.permute.xlu0 %560
      %564 = vrot.lane.b32.xlu0 %v444, 16
      %v565 = vpop.permute.xlu0 %564
      %568 = vrot.lane.b32.xlu0 %v554, 24
      %v569 = vpop.permute.xlu0 %568
      %v571 = vsel %vm120, %v223, %v561
      %vm572 = vcmask 130048
      %v573 = vsel %vm572, %v571, %v565
      %vm574 = vcmask 195584
      %v575 = vsel %vm574, %v573, %v569
      %vm576 = vcmask 261120
      %577 = vst.msk [vmem:[%s111] sm:$0xff] %vm576, %v575
      %p578 = scmp.lt.s32.totalorder %s12, 1
      %s579 = scalar_select %p578, %s12, 1
      %s580 = smul.addr %s579, 8
      %s581 = scalar_lea.vmem %s1, %s580
      // Predicated region
      $region25: #{attention_forward.4} parent=23 // pred_check
        %p582 = pneg %p56
      $region26: #{attention_forward.4} parent=23 // pred_check_branch
        %584 = sbr.rel (%p582) target = $region28
      $region27: #{attention_forward.4} parent=23 // pred_region
        _
      $region28: #{attention_forward.4} parent=23 // pred_fallthru
        _
    $region24: #{attention_forward.4} parent=5 // pred_fallthru
      _
    %p585 = scmp.le.s32.totalorder 2, %s7
    // Predicated region
    $region29: #{attention_forward.4} parent=5 // pred_check
      %p586 = pneg %p585
    $region30: #{attention_forward.4} parent=5 // pred_check_branch
      %588 = sbr.rel (%p586) target = $region32
    $region31: #{attention_forward.4} parent=5 // pred_region
      %s589 = ssub.s32 %s7, 2
      // Predicated region
      $region33: #{attention_forward.4} parent=31 // pred_check
        %p590 = pneg %p62
      $region34: #{attention_forward.4} parent=31 // pred_check_branch
        %592 = sbr.rel (%p590) target = $region36
      $region35: #{attention_forward.4} parent=31 // pred_region
        %p593 = scmp.lt.s32.totalorder %s13, 1
        %s594 = scalar_select %p593, %s13, 1
        %s595 = smul.addr %s594, 8
        %s596 = scalar_lea.vmem %s1, %s595
      $region36: #{attention_forward.4} parent=31 // pred_fallthru
        _
    $region32: #{attention_forward.4} parent=5 // pred_fallthru
      _
  $region6: #{attention_forward.4} parent=0 // loop_footer
    %s11 = sadd.s32 1, %s7
  $region7: #{attention_forward.4} parent=0 // loop_footer_branch
    %6 = sbr.rel target = $region3
  $region8: #{attention_forward.4} parent=0 // loop_exit
    _

</llo_original>
